<compile_context>
chip_gen: v7x
topology: tpu7x:2x2x1
jax: 0.10.0
libtpu: 0.0.40
codegen_flags: <defaults>
</compile_context>

<pallas_src>
import jax
import jax.numpy as jnp
from jax.experimental import pallas as pl
from jax.experimental.pallas import tpu as pltpu


def _round_up(x, m):
    return ((x + m - 1) // m) * m


def _parnet_decoder_kernel(x_ref, w_ref, b_ref, o_ref, acc_ref):
    # x_ref:   (tb, C, t_hw)  native dtype
    # w_ref:   (C, Np)        f32, already transposed and pre-scaled by 1/(H*W)
    # b_ref:   (1, Np)        f32, padded classes = -1e30
    # o_ref:   (tb, Np)       f32
    # acc_ref: (tb, C)        f32 scratch accumulator (pooled sum)
    k = pl.program_id(1)

    @pl.when(k == 0)
    def _init():
        acc_ref[...] = jnp.zeros_like(acc_ref)

    # Accumulate the spatial sum of this tile in f32.  Zero padding of the
    # spatial axis contributes nothing to the sum, so partial tiles are safe.
    x = x_ref[...].astype(jnp.float32)
    acc_ref[...] += jnp.sum(x, axis=-1)

    @pl.when(k == pl.num_programs(1) - 1)
    def _finalize():
        pooled = acc_ref[...]                                   # (tb, C)
        logits = jnp.dot(pooled, w_ref[...],
                         preferred_element_type=jnp.float32) + b_ref[...]
        m = jnp.max(logits, axis=-1, keepdims=True)
        e = jnp.exp(logits - m)
        denom = jnp.sum(e, axis=-1, keepdims=True)
        o_ref[...] = e * pl.reciprocal(denom, approx=True)


def parnet_decoder(x, weight, bias):
    """x: (B, C, H, W) float; weight: (n_classes, C); bias: (n_classes,)."""
    B, C, H, W = x.shape
    N = weight.shape[0]
    HW = H * W
    itemsize = x.dtype.itemsize

    # ---- static tiling decisions --------------------------------------
    MAX_BLOCK_BYTES = 8 * 1024 * 1024   # per-input-buffer cap (v7x safe)

    HW_pad = _round_up(HW, 128)
    t_hw = min(HW_pad, 512)             # lane-axis tile, multiple of 128
    while t_hw > 128 and 8 * C * t_hw * itemsize > MAX_BLOCK_BYTES:
        t_hw -= 128
    HW_pad = _round_up(HW_pad, t_hw)

    B_pad = _round_up(B, 8)
    row_bytes = C * t_hw * itemsize
    tb = min(B_pad, max(8, (MAX_BLOCK_BYTES // row_bytes) // 8 * 8))
    if tb >= B_pad and B_pad >= 16:
        # Split the batch into >=2 programs so both v7x TensorCores get work.
        tb = _round_up(B_pad // 2, 8)
    B_pad = _round_up(B_pad, tb)

    N_pad = _round_up(N, 128)           # lane-dense output stores

    # ---- host-side packing (no dtype upcast of x) ----------------------
    x_p = jnp.pad(x.reshape(B, C, HW),
                  ((0, B_pad - B), (0, 0), (0, HW_pad - HW)))
    # Fold the 1/(H*W) pooling scale into the weight; pad classes to N_pad.
    w_p = jnp.pad(weight.T.astype(jnp.float32) / HW,
                  ((0, 0), (0, N_pad - N)))
    b_p = jnp.pad(bias.astype(jnp.float32), (0, N_pad - N),
                  constant_values=-1e30).reshape(1, N_pad)

    grid = (B_pad // tb, HW_pad // t_hw)

    cost = pl.CostEstimate(
        flops=int(B_pad * C * HW_pad + 2 * B_pad * C * N_pad
                  + 4 * B_pad * N_pad),
        transcendentals=int(B_pad * (N_pad + 1)),
        bytes_accessed=int(x_p.size * itemsize + w_p.size * 4 + b_p.size * 4
                           + B_pad * N_pad * 4),
    )

    out = pl.pallas_call(
        _parnet_decoder_kernel,
        out_shape=jax.ShapeDtypeStruct((B_pad, N_pad), jnp.float32),
        grid_spec=pltpu.PrefetchScalarGridSpec(
            num_scalar_prefetch=0,
            grid=grid,
            in_specs=[
                pl.BlockSpec((tb, C, t_hw), lambda i, k: (i, 0, k)),
                pl.BlockSpec((C, N_pad), lambda i, k: (0, 0)),
                pl.BlockSpec((1, N_pad), lambda i, k: (0, 0)),
            ],
            out_specs=pl.BlockSpec((tb, N_pad), lambda i, k: (i, 0)),
            scratch_shapes=[pltpu.VMEM((tb, C), jnp.float32)],
        ),
        compiler_params=pltpu.CompilerParams(
            dimension_semantics=("parallel", "arbitrary")),
        cost_estimate=cost,
    )(x_p, w_p, b_p)

    return out[:B, :N]


def _reference(x, weight, bias):
    pooled = jnp.mean(x.astype(jnp.float32), axis=(2, 3))
    logits = pooled @ weight.astype(jnp.float32).T + bias.astype(jnp.float32)
    return jax.nn.softmax(logits, axis=1)


if __name__ == "__main__":
    key = jax.random.PRNGKey(0)

    # ---- test 1: spec shapes, f32 input --------------------------------
    B, C, H, W, N = 2, 4, 16, 16, 8
    k1, k2, k3, key = jax.random.split(key, 4)
    x = jax.random.normal(k1, (B, C, H, W), dtype=jnp.float32)
    bound = 1.0 / (C ** 0.5)
    weight = jax.random.uniform(k2, (N, C), jnp.float32, -bound, bound)
    bias = jax.random.uniform(k3, (N,), jnp.float32, -bound, bound)

    out = jax.block_until_ready(parnet_decoder(x, weight, bias))
    ref = _reference(x, weight, bias)
    assert out.shape == (B, N)
    # approx reciprocal in the softmax -> ~1e-4 relative error; 2e-3 is safe.
    assert jnp.allclose(out, ref, atol=2e-3, rtol=2e-3)
    assert jnp.allclose(jnp.sum(out, axis=1), 1.0, atol=2e-3)

    # ---- test 2: bf16 input, multi-step spatial reduction, N % 128 != 0 --
    B, C, H, W, N = 4, 8, 32, 32, 10
    k1, k2, k3, key = jax.random.split(key, 4)
    x = jax.random.normal(k1, (B, C, H, W),
                          dtype=jnp.float32).astype(jnp.bfloat16)
    bound = 1.0 / (C ** 0.5)
    weight = jax.random.uniform(k2, (N, C), jnp.float32, -bound, bound)
    bias = jax.random.uniform(k3, (N,), jnp.float32, -bound, bound)

    out = jax.block_until_ready(parnet_decoder(x, weight, bias))
    ref = _reference(x, weight, bias)
    assert out.shape == (B, N)
    assert jnp.allclose(out, ref, atol=2e-3, rtol=2e-3)
    assert jnp.allclose(jnp.sum(out, axis=1), 1.0, atol=2e-3)

    print("KERNEL_OK")
</pallas_src>

<mosaic_0001>
module attributes {stable_mosaic.version = 11 : i64} {
  func.func @_parnet_decoder_kernel(%arg0: i32, %arg1: i32, %arg2: memref<8x4x256xf32, #tpu.memory_space<vmem>>, %arg3: memref<4x128xf32, #tpu.memory_space<vmem>>, %arg4: memref<1x128xf32, #tpu.memory_space<vmem>>, %arg5: memref<8x128xf32, #tpu.memory_space<vmem>>, %arg6: memref<8x4xf32, #tpu.memory_space<vmem>>) attributes {dimension_semantics = [#tpu.dimension_semantics<parallel>, #tpu.dimension_semantics<arbitrary>], iteration_bounds = array<i64: 1, 1>, scalar_prefetch = 0 : i64, scratch_operands = 1 : i64, tpu.core_type = #tpu.core_type<tc>, window_params = [{transform_indices = @transform_0, window_bounds = array<i64: 8, 4, 256>}, {pipeline_mode = #tpu.pipeline_mode<synchronous>, transform_indices = @transform_1, window_bounds = array<i64: 4, 128>}, {pipeline_mode = #tpu.pipeline_mode<synchronous>, transform_indices = @transform_2, window_bounds = array<i64: 1, 128>}, {transform_indices = @transform_3, window_bounds = array<i64: 8, 128>}]} {
    %c0_i32 = arith.constant 0 : i32
    %0 = arith.cmpi eq, %arg1, %c0_i32 : i32
    %1 = arith.extui %0 : i1 to i32
    %c0_i32_0 = arith.constant 0 : i32
    %2 = arith.cmpi ne, %1, %c0_i32_0 : i32
    scf.if %2 {
      %cst_9 = arith.constant 0.000000e+00 : f32
      %11 = vector.broadcast %cst_9 : f32 to vector<8x4xf32>
      %c0_10 = arith.constant 0 : index
      %c0_11 = arith.constant 0 : index
      %12 = vector.load %arg6[%c0_10, %c0_11] : memref<8x4xf32, #tpu.memory_space<vmem>>, vector<8x4xf32>
      tpu.vector_store %arg6[%c0_10, %c0_11], %11 {strides = array<i32>} : memref<8x4xf32, #tpu.memory_space<vmem>>, vector<8x4xf32>,
    } else {
    }
    %c0 = arith.constant 0 : index
    %c0_1 = arith.constant 0 : index
    %c0_2 = arith.constant 0 : index
    %3 = vector.load %arg2[%c0, %c0_1, %c0_2] : memref<8x4x256xf32, #tpu.memory_space<vmem>>, vector<8x4x256xf32>
    %c0_3 = arith.constant 0 : index
    %c0_4 = arith.constant 0 : index
    %4 = vector.load %arg6[%c0_3, %c0_4] : memref<8x4xf32, #tpu.memory_space<vmem>>, vector<8x4xf32>
    %cst = arith.constant dense<0.000000e+00> : vector<8x4xf32>
    %5 = vector.multi_reduction <add>, %3, %cst [2] : vector<8x4x256xf32> to vector<8x4xf32>
    %6 = arith.addf %4, %5 : vector<8x4xf32>
    %c0_5 = arith.constant 0 : index
    %c0_6 = arith.constant 0 : index
    %7 = vector.load %arg6[%c0_5, %c0_6] : memref<8x4xf32, #tpu.memory_space<vmem>>, vector<8x4xf32>
    tpu.vector_store %arg6[%c0_5, %c0_6], %6 {strides = array<i32>} : memref<8x4xf32, #tpu.memory_space<vmem>>, vector<8x4xf32>,
    %c0_i32_7 = arith.constant 0 : i32
    %8 = arith.cmpi eq, %arg1, %c0_i32_7 : i32
    %9 = arith.extui %8 : i1 to i32
    %c0_i32_8 = arith.constant 0 : i32
    %10 = arith.cmpi ne, %9, %c0_i32_8 : i32
    scf.if %10 {
      %c0_9 = arith.constant 0 : index
      %c0_10 = arith.constant 0 : index
      %11 = vector.load %arg6[%c0_9, %c0_10] : memref<8x4xf32, #tpu.memory_space<vmem>>, vector<8x4xf32>
      %c0_11 = arith.constant 0 : index
      %c0_12 = arith.constant 0 : index
      %12 = vector.load %arg3[%c0_11, %c0_12] : memref<4x128xf32, #tpu.memory_space<vmem>>, vector<4x128xf32>
      %cst_13 = arith.constant dense<0.000000e+00> : vector<8x128xf32>
      %13 = tpu.matmul %11, %12, %cst_13 {dimension_numbers = #tpu.dot_dimension_numbers<[1], [0], [0], [1], [0, 0, 1, 1], [], []>} : vector<8x4xf32>, vector<4x128xf32>, vector<8x128xf32> -> vector<8x128xf32>
      %c0_14 = arith.constant 0 : index
      %c0_15 = arith.constant 0 : index
      %14 = vector.load %arg4[%c0_14, %c0_15] : memref<1x128xf32, #tpu.memory_space<vmem>>, vector<1x128xf32>
      %15 = vector.broadcast %14 : vector<1x128xf32> to vector<8x128xf32>
      %16 = arith.addf %13, %15 : vector<8x128xf32>
      %cst_16 = arith.constant dense<0xFF800000> : vector<8xf32>
      %17 = vector.multi_reduction <maximumf>, %16, %cst_16 [1] : vector<8x128xf32> to vector<8xf32>
      %18 = vector.shape_cast %17 : vector<8xf32> to vector<8x1xf32>
      %19 = vector.broadcast %18 : vector<8x1xf32> to vector<8x128xf32>
      %20 = arith.subf %16, %19 : vector<8x128xf32>
      %21 = math.exp %20 : vector<8x128xf32>
      %cst_17 = arith.constant dense<0.000000e+00> : vector<8xf32>
      %22 = vector.multi_reduction <add>, %21, %cst_17 [1] : vector<8x128xf32> to vector<8xf32>
      %23 = vector.shape_cast %22 : vector<8xf32> to vector<8x1xf32>
      %24 = tpu.reciprocal %23 {approx = true} : vector<8x1xf32> -> vector<8x1xf32>
      %25 = vector.broadcast %24 : vector<8x1xf32> to vector<8x128xf32>
      %26 = arith.mulf %21, %25 : vector<8x128xf32>
      %c0_18 = arith.constant 0 : index
      %c0_19 = arith.constant 0 : index
      %27 = vector.load %arg5[%c0_18, %c0_19] : memref<8x128xf32, #tpu.memory_space<vmem>>, vector<8x128xf32>
      tpu.vector_store %arg5[%c0_18, %c0_19], %26 {strides = array<i32>} : memref<8x128xf32, #tpu.memory_space<vmem>>, vector<8x128xf32>,
    } else {
    }
    return
  }
  func.func @transform_0(%arg0: i32, %arg1: i32) -> (i32, i32, i32) {
    %c0_i32 = arith.constant 0 : i32
    %c0_i32_0 = arith.constant 0 : i32
    return %arg0, %c0_i32, %arg1 : i32, i32, i32
  }
  func.func @transform_1(%arg0: i32, %arg1: i32) -> (i32, i32) {
    %c0_i32 = arith.constant 0 : i32
    %c0_i32_0 = arith.constant 0 : i32
    %c0_i32_1 = arith.constant 0 : i32
    return %c0_i32, %c0_i32_0 : i32, i32
  }
  func.func @transform_2(%arg0: i32, %arg1: i32) -> (i32, i32) {
    %c0_i32 = arith.constant 0 : i32
    %c0_i32_0 = arith.constant 0 : i32
    %c0_i32_1 = arith.constant 0 : i32
    return %c0_i32, %c0_i32_0 : i32, i32
  }
  func.func @transform_3(%arg0: i32, %arg1: i32) -> (i32, i32) {
    %c0_i32 = arith.constant 0 : i32
    %c0_i32_0 = arith.constant 0 : i32
    return %arg0, %c0_i32 : i32, i32
  }
}

</mosaic_0001>

<llo_original>
// kernel: tpu_custom_call.1
$region0: #{tpu_custom_call.1}
  #allocation0 [shape = 'u32[]', space=smem, size = 0x4, offset = 0x4, fixed_abs, tag = 'smem constant byte address 0x4 - core index']
  #allocation1 [shape = 'u32[144,128]{1,0:T(1,128)}', space=vmem, size = 0x12000, scoped, tag = 'internal scratch']
  #allocation2 [shape = 'f32[8,4]{1,0:T(8,128)}', space=vmem, size = 0x1000, scoped, tag = 'scratch operand']
  %s0 = inlined_call_operand.hbm [shape: f32[8,4,256], index: 0, kind: input, shape index: {}]
  %s1 = inlined_call_operand.hbm [shape: f32[4,128], index: 1, kind: input, shape index: {}]
  %s2 = inlined_call_operand.vmem [shape: f32[1,128], index: 2, kind: input, shape index: {}]
  %s3 = inlined_call_operand.hbm [shape: f32[8,128], index: 3, kind: output, shape index: {}]
  %s4 = sld [smem:[#allocation0]]
  $region38: #{tpu_custom_call.1} parent=0
    _
  %s6 = ssub.s32 1, %s4
  %s7 = scalar_select 0, %s6, %s4
  $region1: #{tpu_custom_call.1} parent=0
    #allocation3 [shape = 'u8[32768]{0}', space=vmem, size = 0x8000, scoped, tag = 'input window, operand 0, single buffered']
    #allocation4 [shape = 's32[1]{0}', space=sflag, size = 0x4, scoped, tag = 'scoped memory for tpu_custom_call.1']
    #allocation5 [shape = 's32[1]{0}', space=sflag, size = 0x4, scoped, tag = 'scoped memory for tpu_custom_call.1']
    #allocation6 [shape = 'u8[2048]{0}', space=vmem, size = 0x800, scoped, tag = 'input window, operand 1, single buffered']
    #allocation7 [shape = 's32[1]{0}', space=sflag, size = 0x4, scoped, tag = 'scoped memory for tpu_custom_call.1']
    #allocation8 [shape = 'u8[4096]{0}', space=vmem, size = 0x1000, scoped, tag = 'output window, operand 0, single buffered']
    %8 = vsyncpa [#allocation4], 0
    %9 = vsyncpa [#allocation7], 0
    %10 = vsyncpa [#allocation5], 0
    // Predicated region
    $region2: #{tpu_custom_call.1} parent=1 // pred_check
      _
    $region3: #{tpu_custom_call.1} parent=1 // pred_check_branch
      %12 = sbr.rel (0) target = $region5
    $region4: #{tpu_custom_call.1} parent=1 // pred_region
      %s14 = ssub.s32 1024, 1024
      %15 = vsyncadd [#allocation4], %s14
      %s16 = sshll.u32 [#allocation3], 4
      %s17 = int_to_ptr.vmem [resolvable:$true] %s16
      %22 = dma.hbm_to_vmem [thread:$0]  %s0, 1024, %s17, [#allocation4], 128, 128, 8
    $region5: #{tpu_custom_call.1} parent=1 // pred_fallthru
      _
    // Predicated region
    $region6: #{tpu_custom_call.1} parent=1 // pred_check
      _
    $region7: #{tpu_custom_call.1} parent=1 // pred_check_branch
      %24 = sbr.rel (0) target = $region9
    $region8: #{tpu_custom_call.1} parent=1 // pred_region
      %s26 = ssub.s32 64, 64
      %27 = vsyncadd [#allocation7], %s26
      %s29 = sshll.u32 [#allocation6], 4
      %s30 = int_to_ptr.vmem [resolvable:$true] %s29
      %32 = dma.hbm_to_vmem [thread:$0]  %s1, 64, %s30, [#allocation7]
    $region9: #{tpu_custom_call.1} parent=1 // pred_fallthru
      _
    // Predicated region
    $region10: #{tpu_custom_call.1} parent=1 // pred_check
      _
    $region11: #{tpu_custom_call.1} parent=1 // pred_check_branch
      %34 = sbr.rel (0) target = $region13
    $region12: #{tpu_custom_call.1} parent=1 // pred_region
      _
    $region13: #{tpu_custom_call.1} parent=1 // pred_fallthru
      _
    // Predicated region
    $region14: #{tpu_custom_call.1} parent=1 // pred_check
      _
    $region15: #{tpu_custom_call.1} parent=1 // pred_check_branch
      %36 = sbr.rel (0) target = $region17
    $region16: #{tpu_custom_call.1} parent=1 // pred_region
      %37 = dma.done [#allocation4], 1024
    $region17: #{tpu_custom_call.1} parent=1 // pred_fallthru
      _
    // Predicated region
    $region18: #{tpu_custom_call.1} parent=1 // pred_check
      _
    $region19: #{tpu_custom_call.1} parent=1 // pred_check_branch
      %39 = sbr.rel (0) target = $region21
    $region20: #{tpu_custom_call.1} parent=1 // pred_region
      %40 = dma.done [#allocation7], 64
    $region21: #{tpu_custom_call.1} parent=1 // pred_fallthru
      _
    %p41 = scmp.eq.s32.totalorder 0, 0
    // Predicated region
    $region22: #{tpu_custom_call.1} parent=1 // pred_check
      %p42 = pneg %p41
    $region23: #{tpu_custom_call.1} parent=1 // pred_check_branch
      %44 = sbr.rel (%p42) target = $region25
    $region24: #{tpu_custom_call.1} parent=1 // pred_region
      %vm45 = vcmask 31744
      %46 = vst.msk [vmem:[#allocation2] sm:$0xff] %vm45, 0.0
    $region25: #{tpu_custom_call.1} parent=1 // pred_fallthru
      _
    %v47 = vld [vmem:[#allocation3] sm:$0xff]
    %v48 = vld [vmem:[#allocation3 + $0x8] sm:$0xff]
    %v49 = vld [vmem:[#allocation3 + $0x10] sm:$0xff]
    %v50 = vld [vmem:[#allocation3 + $0x18] sm:$0xff]
    %v51 = vld [vmem:[#allocation3 + $0x20] sm:$0xff]
    %v52 = vld [vmem:[#allocation3 + $0x28] sm:$0xff]
    %v53 = vld [vmem:[#allocation3 + $0x30] sm:$0xff]
    %v54 = vld [vmem:[#allocation3 + $0x38] sm:$0xff]
    %v55 = vld [vmem:[#allocation2] sm:$0xff]
    %v64 = vcombine.high %v47, %v47
    %v65 = vcombine.high %v48, %v48
    %v66 = vcombine.high %v49, %v49
    %v67 = vcombine.high %v50, %v50
    %v68 = vcombine.high %v51, %v51
    %v69 = vcombine.high %v52, %v52
    %v70 = vcombine.high %v53, %v53
    %v71 = vcombine.high %v54, %v54
    %vm80 = vcmask 1043456
    %v81 = vsel %vm80, %v47, 0.0
    %v82 = vsel %vm80, %v64, 0.0
    %v83 = vadd.f32 %v81, %v82
    %84 = vadd.xlane.f32.xlu0 %v83
    %v85 = vpop.xlane.xlu0 %84
    %v86 = vsel %vm80, %v48, 0.0
    %v87 = vsel %vm80, %v65, 0.0
    %v88 = vadd.f32 %v86, %v87
    %89 = vadd.xlane.f32.xlu0 %v88
    %v90 = vpop.xlane.xlu0 %89
    %v91 = vsel %vm80, %v49, 0.0
    %v92 = vsel %vm80, %v66, 0.0
    %v93 = vadd.f32 %v91, %v92
    %94 = vadd.xlane.f32.xlu0 %v93
    %v95 = vpop.xlane.xlu0 %94
    %v96 = vsel %vm80, %v50, 0.0
    %v97 = vsel %vm80, %v67, 0.0
    %v98 = vadd.f32 %v96, %v97
    %99 = vadd.xlane.f32.xlu0 %v98
    %v100 = vpop.xlane.xlu0 %99
    %v101 = vsel %vm80, %v51, 0.0
    %v102 = vsel %vm80, %v68, 0.0
    %v103 = vadd.f32 %v101, %v102
    %104 = vadd.xlane.f32.xlu0 %v103
    %v105 = vpop.xlane.xlu0 %104
    %v106 = vsel %vm80, %v52, 0.0
    %v107 = vsel %vm80, %v69, 0.0
    %v108 = vadd.f32 %v106, %v107
    %109 = vadd.xlane.f32.xlu0 %v108
    %v110 = vpop.xlane.xlu0 %109
    %v111 = vsel %vm80, %v53, 0.0
    %v112 = vsel %vm80, %v70, 0.0
    %v113 = vadd.f32 %v111, %v112
    %114 = vadd.xlane.f32.xlu0 %v113
    %v115 = vpop.xlane.xlu0 %114
    %v116 = vsel %vm80, %v54, 0.0
    %v117 = vsel %vm80, %v71, 0.0
    %v118 = vadd.f32 %v116, %v117
    %119 = vadd.xlane.f32.xlu0 %v118
    %v120 = vpop.xlane.xlu0 %119
    %v129 = vlaneseq
    %v130 = vand.u32 %v129, 127
    %v131 = vlaneseq
    %v132 = vshrl.u32 %v131, 7
    %v133 = vsub.s32 %v130, %v132
    %v134 = vrot.slane %v85, %v133
    %v135 = vlaneseq
    %v136 = vshrl.u32 %v135, 7
    %v137 = vsub.s32 %v130, %v136
    %v138 = vrot.slane %v90, %v137
    %v139 = vlaneseq
    %v140 = vshrl.u32 %v139, 7
    %v141 = vsub.s32 %v130, %v140
    %v142 = vrot.slane %v95, %v141
    %v143 = vlaneseq
    %v144 = vshrl.u32 %v143, 7
    %v145 = vsub.s32 %v130, %v144
    %v146 = vrot.slane %v100, %v145
    %v147 = vlaneseq
    %v148 = vshrl.u32 %v147, 7
    %v149 = vsub.s32 %v130, %v148
    %v150 = vrot.slane %v105, %v149
    %v151 = vlaneseq
    %v152 = vshrl.u32 %v151, 7
    %v153 = vsub.s32 %v130, %v152
    %v154 = vrot.slane %v110, %v153
    %v155 = vlaneseq
    %v156 = vshrl.u32 %v155, 7
    %v157 = vsub.s32 %v130, %v156
    %v158 = vrot.slane %v115, %v157
    %v159 = vlaneseq
    %v160 = vshrl.u32 %v159, 7
    %v161 = vsub.s32 %v130, %v160
    %v162 = vrot.slane %v120, %v161
    %vm163 = vcmask 1041409
    %v164 = vsel %vm163, %v138, %v134
    %vm165 = vcmask 1042434
    %v166 = vsel %vm165, %v142, %v164
    %vm167 = vcmask 1043459
    %v168 = vsel %vm167, %v146, %v166
    %vm169 = vcmask 1044484
    %v170 = vsel %vm169, %v150, %v168
    %vm171 = vcmask 1045509
    %v172 = vsel %vm171, %v154, %v170
    %vm173 = vcmask 1046534
    %v174 = vsel %vm173, %v158, %v172
    %vm175 = vcmask 1047559
    %v176 = vsel %vm175, %v162, %v174
    %v178 = vadd.f32 %v55, %v176
    %vm179 = vcmask 31744
    %180 = vst.msk [vmem:[#allocation2] sm:$0xff] %vm179, %v178
    // Predicated region
    $region26: #{tpu_custom_call.1} parent=1 // pred_check
      %p181 = pneg %p41
    $region27: #{tpu_custom_call.1} parent=1 // pred_check_branch
      %183 = sbr.rel (%p181) target = $region29
    $region28: #{tpu_custom_call.1} parent=1 // pred_region
      %v184 = vld [vmem:[#allocation2] sm:$0xff]
      %v185 = vld [vmem:[#allocation6] sm:$0xf]
      %v186 = vld [vmem:[%s2] sm:$0x1]
      %v188 = vlaneseq
      %v189 = vshrl.u32 %v188, 7
      %v190 = vsub.s32 0, %v189
      %v191 = vrot.slane %v186, %v190
      %v194 = vsel %vm179, %v184, 0
      %v197 = vsel %vm80, %v185, 0
      %199 = vmatprep.subr.mxu0 0.0
      %200 = vmatpush1.msra.mxu0 %v197
      %201 = vmatprep.subr.mxu0 0.0
      %202 = vmatpush1.msra.mxu0 0.0
      %203 = vmatprep.subr.mxu0 0.0
      %204 = vmatpush1.msra.mxu0 0.0
      %205 = vmatprep.subr.mxu0 0.0
      %206 = vmatpush1.msra.mxu0 0.0
      %207 = vmatprep.subr.mxu0 0.0
      %208 = vmatpush1.msra.mxu0 0.0
      %209 = vmatprep.subr.mxu0 0.0
      %210 = vmatpush1.msra.mxu0 0.0
      %211 = vmatprep.subr.mxu0 0.0
      %212 = vmatpush1.msra.mxu0 0.0
      %213 = vmatprep.subr.mxu0 0.0
      %214 = vmatpush1.msra.mxu0 0.0
      %215 = vmatprep.subr.mxu0 0.0
      %216 = vmatpush1.msra.mxu0 0.0
      %217 = vmatprep.subr.mxu0 0.0
      %218 = vmatpush1.msra.mxu0 0.0
      %219 = vmatprep.subr.mxu0 0.0
      %220 = vmatpush1.msra.mxu0 0.0
      %221 = vmatprep.subr.mxu0 0.0
      %222 = vmatpush1.msra.mxu0 0.0
      %223 = vmatprep.subr.mxu0 0.0
      %224 = vmatpush1.msra.mxu0 0.0
      %225 = vmatprep.subr.mxu0 0.0
      %226 = vmatpush1.msra.mxu0 0.0
      %227 = vmatprep.subr.mxu0 0.0
      %228 = vmatpush1.msra.mxu0 0.0
      %229 = vmatprep.subr.mxu0 0.0
      %230 = vmatpush1.msra.mxu0 0.0
      %231 = vmatprep.subr.mxu0 0.0
      %232 = vmatpush1.msra.mxu0 0.0
      %233 = vmatprep.subr.mxu0 0.0
      %234 = vmatpush1.msra.mxu0 0.0
      %235 = vmatprep.subr.mxu0 0.0
      %236 = vmatpush1.msra.mxu0 0.0
      %237 = vmatprep.subr.mxu0 0.0
      %238 = vmatpush1.msra.mxu0 0.0
      %239 = vmatprep.subr.mxu0 0.0
      %240 = vmatpush1.msra.mxu0 0.0
      %241 = vmatprep.subr.mxu0 0.0
      %242 = vmatpush1.msra.mxu0 0.0
      %243 = vmatprep.subr.mxu0 0.0
      %244 = vmatpush1.msra.mxu0 0.0
      %245 = vmatprep.subr.mxu0 0.0
      %246 = vmatpush1.msra.mxu0 0.0
      %247 = vmatprep.subr.mxu0 0.0
      %248 = vmatpush1.msra.mxu0 0.0
      %249 = vmatprep.subr.mxu0 0.0
      %250 = vmatpush1.msra.mxu0 0.0
      %251 = vmatprep.subr.mxu0 0.0
      %252 = vmatpush1.msra.mxu0 0.0
      %253 = vmatprep.subr.mxu0 0.0
      %254 = vmatpush1.msra.mxu0 0.0
      %255 = vmatprep.subr.mxu0 0.0
      %256 = vmatpush1.msra.mxu0 0.0
      %257 = vmatprep.subr.mxu0 0.0
      %258 = vmatpush1.msra.mxu0 0.0
      %259 = vmatprep.subr.mxu0 0.0
      %260 = vmatpush1.msra.mxu0 0.0
      %261 = vmatprep.subr.mxu0 0.0
      %262 = vmatpush1.msra.mxu0 0.0
      %263 = vmatprep.mubr.f32.mxu0 0.0
      %264 = vmatmul.mubr.f32.gmra.mrb[0].mxu0 %v194
      %v265 = vpop.f32.mrb[0].mxu0
      %v266 = vadd.f32 %v191, %v265
      %v267 = vpop.f32.mrb[0].mxu0
      %268 = vdwg.mxu0
      %269 = vmax.xlane.f32.xlu0 %v266
      %v270 = vpop.xlane.xlu0 %269
      %v271 = vsub.f32 %v266, %v270
      %v272 = vmul.f32 %v271, 1.442695
      %v273 = vpow.pop %v272
      %274 = vadd.xlane.f32.xlu0 %v273
      %v275 = vpop.xlane.xlu0 %274
      %v276 = vrcp.pop %v275
      %v277 = vmul.f32 %v273, %v276
      %278 = vst [vmem:[#allocation8] sm:$0xff] %v277
    $region29: #{tpu_custom_call.1} parent=1 // pred_fallthru
      _
    // Predicated region
    $region30: #{tpu_custom_call.1} parent=1 // pred_check
      _
    $region31: #{tpu_custom_call.1} parent=1 // pred_check_branch
      %280 = sbr.rel (0) target = $region33
    $region32: #{tpu_custom_call.1} parent=1 // pred_region
      %s282 = ssub.s32 128, 128
      %283 = vsyncadd [#allocation5], %s282
      %s285 = sshll.u32 [#allocation8], 4
      %s286 = int_to_ptr.vmem [resolvable:$true] %s285
      %288 = dma.vmem_to_hbm [thread:$0]  %s286, 128, %s3, [#allocation5]
    $region33: #{tpu_custom_call.1} parent=1 // pred_fallthru
      _
    // Predicated region
    $region34: #{tpu_custom_call.1} parent=1 // pred_check
      _
    $region35: #{tpu_custom_call.1} parent=1 // pred_check_branch
      %290 = sbr.rel (0) target = $region37
    $region36: #{tpu_custom_call.1} parent=1 // pred_region
      %291 = dma.done [#allocation5], 128
    $region37: #{tpu_custom_call.1} parent=1 // pred_fallthru
      _
    %292 = vsyncpa [#allocation4], 1
    %293 = vsyncpa [#allocation7], 1
    %294 = vsyncpa [#allocation5], 1

</llo_original>
